<compile_context>
chip_gen: v7x
topology: tpu7x:2x2x1
jax: 0.10.0
libtpu: 0.0.40
codegen_flags: <defaults>
</compile_context>

<pallas_src>
import jax
import jax.numpy as jnp
from jax.experimental import pallas as pl
from jax.experimental.pallas import tpu as pltpu


def _label_stats_kernel(x_ref, lab_ref, lc_ref,
                        mean_ref, min_ref, max_ref,
                        sum_acc, min_acc, max_acc):
    # x_ref   : VMEM (1, C, s_tile) f32   -- input tile for batch n
    # lab_ref : VMEM (1, 1, s_tile) i32   -- label tile for batch n
    # lc_ref  : VMEM (1, 1, l_tile) f32   -- per-label pixel counts (this tile)
    # outputs : VMEM (1, C, l_tile) f32   -- mean / min / max (written at end)
    # scratch : VMEM (C, l_tile) f32 each -- running sum / min / max
    lt = pl.program_id(1)
    st = pl.program_id(2)
    n_st = pl.num_programs(2)

    c, l_tile = sum_acc.shape
    s_tile = x_ref.shape[-1]

    @pl.when(st == 0)
    def _init():
        sum_acc[...] = jnp.zeros((c, l_tile), jnp.float32)
        min_acc[...] = jnp.full((c, l_tile), jnp.inf, jnp.float32)
        max_acc[...] = jnp.full((c, l_tile), -jnp.inf, jnp.float32)

    x = x_ref[0]          # (C, s_tile) f32
    lab = lab_ref[0]      # (1, s_tile) i32

    # One-hot label matrix for this label tile (global ids offset by lt*l_tile).
    label_ids = lt * l_tile + jax.lax.broadcasted_iota(
        jnp.int32, (l_tile, s_tile), 0)
    onehot = lab == label_ids                       # (l_tile, s_tile) bool

    # --- sums on the MXU: (C,S) x (l_tile,S) contracted over S -> (C,l_tile) -
    sum_acc[...] += jax.lax.dot_general(
        x, onehot.astype(jnp.float32),
        dimension_numbers=(((1,), (1,)), ((), ())),
        preferred_element_type=jnp.float32)

    # --- masked min / max over the spatial (lane) axis ----------------------
    # Layout (C, l_tile, s_tile): last two dims are sublane/lane dense.
    mask = onehot[None, :, :]                       # (1, l_tile, s_tile)
    xb = x[:, None, :]                              # (C, 1, s_tile)
    min_acc[...] = jnp.minimum(
        min_acc[...], jnp.min(jnp.where(mask, xb, jnp.inf), axis=-1))
    max_acc[...] = jnp.maximum(
        max_acc[...], jnp.max(jnp.where(mask, xb, -jnp.inf), axis=-1))

    @pl.when(st == n_st - 1)
    def _finalize():
        cnt = lc_ref[0]                            # (1, l_tile)
        cnt_c = jnp.maximum(cnt, 1.0)
        inv = pl.reciprocal(cnt_c, approx=True)    # EUP slot (otherwise idle)
        inv = inv * (2.0 - cnt_c * inv)            # one Newton step -> ~f32
        empty = cnt == 0.0                         # (1, l_tile)

        mean_ref[0] = jnp.where(empty, 0.0, sum_acc[...] * inv)
        min_ref[0] = jnp.where(empty, 0.0, min_acc[...])
        max_ref[0] = jnp.where(empty, 0.0, max_acc[...])


def label_stats_accumulator(x, labels, labelcount, *, s_tile=512, l_tile=None):
    """x: (N, C, H, W) float; labels: (N, H, W) int32 in [0, L);
    labelcount: (N, L) int32.  Returns (N, L, C, 3) = [mean, min, max]."""
    N, C, H, W = x.shape
    S = H * W
    L = labelcount.shape[1]

    # ---- label tiling (sublane axis of the one-hot / accumulators) ---------
    L_pad8 = ((L + 7) // 8) * 8
    if l_tile is None:
        l_tile = min(L_pad8, 128)
    if l_tile >= L_pad8:
        l_tile = L_pad8                       # single tile = full extent
    else:
        l_tile = max(128, (l_tile // 128) * 128)   # lane/layout-safe tile
    L_pad = ((L_pad8 + l_tile - 1) // l_tile) * l_tile
    n_lt = L_pad // l_tile

    # ---- spatial tiling (lane axis), clamped so temps stay small -----------
    s_tile = max(128, (s_tile // 128) * 128)
    s_tile = min(s_tile, ((S + 127) // 128) * 128)
    while s_tile > 128 and C * l_tile * s_tile * 4 > (4 << 20):
        s_tile -= 128
    S_pad = ((S + s_tile - 1) // s_tile) * s_tile
    n_st = S_pad // s_tile

    x_f = x.reshape(N, C, S).astype(jnp.float32)
    lab = labels.reshape(N, 1, S).astype(jnp.int32)
    if S_pad != S:
        x_f = jnp.pad(x_f, ((0, 0), (0, 0), (0, S_pad - S)))
        # Padded pixels get label -1 -> excluded from every real label.
        lab = jnp.pad(lab, ((0, 0), (0, 0), (0, S_pad - S)), constant_values=-1)

    lc = labelcount.astype(jnp.float32)
    if L_pad != L:
        lc = jnp.pad(lc, ((0, 0), (0, L_pad - L)))   # padded labels -> empty
    lc = lc.reshape(N, 1, L_pad)

    grid_spec = pltpu.PrefetchScalarGridSpec(
        num_scalar_prefetch=0,
        grid=(N, n_lt, n_st),
        in_specs=[
            pl.BlockSpec((1, C, s_tile), lambda n, lt, st: (n, 0, st)),
            pl.BlockSpec((1, 1, s_tile), lambda n, lt, st: (n, 0, st)),
            pl.BlockSpec((1, 1, l_tile), lambda n, lt, st: (n, 0, lt)),
        ],
        out_specs=[
            pl.BlockSpec((1, C, l_tile), lambda n, lt, st: (n, 0, lt)),
            pl.BlockSpec((1, C, l_tile), lambda n, lt, st: (n, 0, lt)),
            pl.BlockSpec((1, C, l_tile), lambda n, lt, st: (n, 0, lt)),
        ],
        scratch_shapes=[
            pltpu.VMEM((C, l_tile), jnp.float32),
            pltpu.VMEM((C, l_tile), jnp.float32),
            pltpu.VMEM((C, l_tile), jnp.float32),
        ],
    )

    mean, mn, mx = pl.pallas_call(
        _label_stats_kernel,
        out_shape=(
            jax.ShapeDtypeStruct((N, C, L_pad), jnp.float32),
            jax.ShapeDtypeStruct((N, C, L_pad), jnp.float32),
            jax.ShapeDtypeStruct((N, C, L_pad), jnp.float32),
        ),
        grid_spec=grid_spec,
        compiler_params=pltpu.CompilerParams(
            dimension_semantics=("parallel", "parallel", "arbitrary")),
    )(x_f, lab, lc)

    stats = jnp.stack([mean, mn, mx], axis=-1)       # (N, C, L_pad, 3)
    stats = jnp.transpose(stats, (0, 2, 1, 3))       # (N, L_pad, C, 3)
    return stats[:, :L]


def _reference(x, labels, labelcount):
    N, C, H, W = x.shape
    L = labelcount.shape[1]
    x_f = x.reshape(N, C, 1, -1).astype(jnp.float32)          # (N, C, 1, S)
    lab = labels.reshape(N, 1, 1, -1)                          # (N, 1, 1, S)
    onehot = lab == jnp.arange(L).reshape(1, 1, L, 1)          # (N, 1, L, S)

    sums = jnp.sum(jnp.where(onehot, x_f, 0.0), axis=-1)       # (N, C, L)
    cnt = labelcount.astype(jnp.float32)[:, None, :]           # (N, 1, L)
    mean = sums / jnp.maximum(cnt, 1.0)
    mn = jnp.min(jnp.where(onehot, x_f, jnp.inf), axis=-1)
    mx = jnp.max(jnp.where(onehot, x_f, -jnp.inf), axis=-1)

    empty = (labelcount == 0)[:, None, :]
    mean = jnp.where(empty, 0.0, mean)
    mn = jnp.where(empty, 0.0, mn)
    mx = jnp.where(empty, 0.0, mx)
    stats = jnp.stack([mean, mn, mx], axis=-1)                 # (N, C, L, 3)
    return jnp.transpose(stats, (0, 2, 1, 3))                  # (N, L, C, 3)


def _check(out, ref, tag):
    # min/max are exact selects -> tight tolerance; mean goes through the MXU
    # (f32 matmul path) -> modest tolerance.
    assert jnp.allclose(out[..., 1], ref[..., 1], atol=1e-6, rtol=1e-6), \
        f"{tag}: min mismatch"
    assert jnp.allclose(out[..., 2], ref[..., 2], atol=1e-6, rtol=1e-6), \
        f"{tag}: max mismatch"
    assert jnp.allclose(out[..., 0], ref[..., 0], atol=5e-3, rtol=5e-3), \
        f"{tag}: mean mismatch"


if __name__ == "__main__":
    key = jax.random.PRNGKey(0)
    k1, k2, k3, k4 = jax.random.split(key, 4)

    # Case 1: small L (single label tile), 2 spatial steps -> exercises the
    # cross-tile accumulation path.
    N, C, H, W, L = 2, 4, 16, 16, 8
    x = jax.random.normal(k1, (N, C, H, W), dtype=jnp.float32)
    labels = jax.random.randint(k2, (N, H, W), 0, L, dtype=jnp.int32)
    labelcount = jnp.sum(
        labels.reshape(N, -1)[:, :, None] == jnp.arange(L)[None, None, :],
        axis=1).astype(jnp.int32)                              # (N, L)

    out = label_stats_accumulator(x, labels, labelcount, s_tile=128)
    out = jax.block_until_ready(out)
    assert out.shape == (N, L, C, 3)
    _check(out, _reference(x, labels, labelcount), "case1")

    # Case 2: L > 128 (two label tiles, padded label axis, many empty labels)
    # plus 2 spatial steps.
    L2 = 200
    x2 = jax.random.normal(k3, (N, C, H, W), dtype=jnp.float32)
    labels2 = jax.random.randint(k4, (N, H, W), 0, L2, dtype=jnp.int32)
    labelcount2 = jnp.sum(
        labels2.reshape(N, -1)[:, :, None] == jnp.arange(L2)[None, None, :],
        axis=1).astype(jnp.int32)                              # (N, L2)

    out2 = label_stats_accumulator(x2, labels2, labelcount2,
                                   s_tile=128, l_tile=128)
    out2 = jax.block_until_ready(out2)
    assert out2.shape == (N, L2, C, 3)
    _check(out2, _reference(x2, labels2, labelcount2), "case2")

    print("KERNEL_OK")
</pallas_src>

<mosaic_0001>
module attributes {stable_mosaic.version = 11 : i64} {
  func.func @_label_stats_kernel(%arg0: i32, %arg1: i32, %arg2: i32, %arg3: memref<1x4x128xf32, #tpu.memory_space<vmem>>, %arg4: memref<1x1x128xi32, #tpu.memory_space<vmem>>, %arg5: memref<1x1x8xf32, #tpu.memory_space<vmem>>, %arg6: memref<1x4x8xf32, #tpu.memory_space<vmem>>, %arg7: memref<1x4x8xf32, #tpu.memory_space<vmem>>, %arg8: memref<1x4x8xf32, #tpu.memory_space<vmem>>, %arg9: memref<4x8xf32, #tpu.memory_space<vmem>>, %arg10: memref<4x8xf32, #tpu.memory_space<vmem>>, %arg11: memref<4x8xf32, #tpu.memory_space<vmem>>) attributes {dimension_semantics = [#tpu.dimension_semantics<parallel>, #tpu.dimension_semantics<parallel>, #tpu.dimension_semantics<arbitrary>], iteration_bounds = array<i64: 2, 1, 2>, scalar_prefetch = 0 : i64, scratch_operands = 3 : i64, tpu.core_type = #tpu.core_type<tc>, window_params = [{transform_indices = @transform_0, window_bounds = array<i64: 1, 4, 128>}, {transform_indices = @transform_1, window_bounds = array<i64: 1, 1, 128>}, {transform_indices = @transform_2, window_bounds = array<i64: 1, 1, 8>}, {transform_indices = @transform_3, window_bounds = array<i64: 1, 4, 8>}, {transform_indices = @transform_4, window_bounds = array<i64: 1, 4, 8>}, {transform_indices = @transform_5, window_bounds = array<i64: 1, 4, 8>}]} {
    %c0_i32 = arith.constant 0 : i32
    %0 = arith.cmpi eq, %arg2, %c0_i32 : i32
    %1 = arith.extui %0 : i1 to i32
    %c0_i32_0 = arith.constant 0 : i32
    %2 = arith.cmpi ne, %1, %c0_i32_0 : i32
    scf.if %2 {
      %cst_23 = arith.constant 0.000000e+00 : f32
      %44 = vector.broadcast %cst_23 : f32 to vector<4x8xf32>
      %c0_24 = arith.constant 0 : index
      %c0_25 = arith.constant 0 : index
      %45 = vector.load %arg9[%c0_24, %c0_25] : memref<4x8xf32, #tpu.memory_space<vmem>>, vector<4x8xf32>
      tpu.vector_store %arg9[%c0_24, %c0_25], %44 {strides = array<i32>} : memref<4x8xf32, #tpu.memory_space<vmem>>, vector<4x8xf32>,
      %cst_26 = arith.constant 0x7F800000 : f32
      %46 = vector.broadcast %cst_26 : f32 to vector<4x8xf32>
      %c0_27 = arith.constant 0 : index
      %c0_28 = arith.constant 0 : index
      %47 = vector.load %arg10[%c0_27, %c0_28] : memref<4x8xf32, #tpu.memory_space<vmem>>, vector<4x8xf32>
      tpu.vector_store %arg10[%c0_27, %c0_28], %46 {strides = array<i32>} : memref<4x8xf32, #tpu.memory_space<vmem>>, vector<4x8xf32>,
      %cst_29 = arith.constant 0xFF800000 : f32
      %48 = vector.broadcast %cst_29 : f32 to vector<4x8xf32>
      %c0_30 = arith.constant 0 : index
      %c0_31 = arith.constant 0 : index
      %49 = vector.load %arg11[%c0_30, %c0_31] : memref<4x8xf32, #tpu.memory_space<vmem>>, vector<4x8xf32>
      tpu.vector_store %arg11[%c0_30, %c0_31], %48 {strides = array<i32>} : memref<4x8xf32, #tpu.memory_space<vmem>>, vector<4x8xf32>,
    } else {
    }
    %c0 = arith.constant 0 : index
    %c0_1 = arith.constant 0 : index
    %c0_2 = arith.constant 0 : index
    %3 = vector.load %arg3[%c0, %c0_1, %c0_2] : memref<1x4x128xf32, #tpu.memory_space<vmem>>, vector<1x4x128xf32>
    %4 = vector.shape_cast %3 : vector<1x4x128xf32> to vector<4x128xf32>
    %c0_3 = arith.constant 0 : index
    %c0_4 = arith.constant 0 : index
    %c0_5 = arith.constant 0 : index
    %5 = vector.load %arg4[%c0_3, %c0_4, %c0_5] : memref<1x1x128xi32, #tpu.memory_space<vmem>>, vector<1x1x128xi32>
    %6 = vector.shape_cast %5 : vector<1x1x128xi32> to vector<1x128xi32>
    %c8_i32 = arith.constant 8 : i32
    %7 = arith.muli %arg1, %c8_i32 : i32
    %8 = tpu.iota {dimensions = array<i32: 0>} : vector<8x128xi32>
    %9 = vector.broadcast %7 : i32 to vector<8x128xi32>
    %10 = arith.addi %9, %8 : vector<8x128xi32>
    %11 = vector.broadcast %6 : vector<1x128xi32> to vector<8x128xi32>
    %12 = arith.cmpi eq, %11, %10 : vector<8x128xi32>
    %c0_6 = arith.constant 0 : index
    %c0_7 = arith.constant 0 : index
    %13 = vector.load %arg9[%c0_6, %c0_7] : memref<4x8xf32, #tpu.memory_space<vmem>>, vector<4x8xf32>
    %14 = arith.extui %12 : vector<8x128xi1> to vector<8x128xi32>
    %15 = arith.sitofp %14 : vector<8x128xi32> to vector<8x128xf32>
    %cst = arith.constant dense<0.000000e+00> : vector<4x8xf32>
    %16 = tpu.matmul %4, %15, %cst {dimension_numbers = #tpu.dot_dimension_numbers<[1], [1], [0], [0], [0, 0, 1, 0], [], []>} : vector<4x128xf32>, vector<8x128xf32>, vector<4x8xf32> -> vector<4x8xf32>
    %17 = arith.addf %13, %16 : vector<4x8xf32>
    %c0_8 = arith.constant 0 : index
    %c0_9 = arith.constant 0 : index
    %18 = vector.load %arg9[%c0_8, %c0_9] : memref<4x8xf32, #tpu.memory_space<vmem>>, vector<4x8xf32>
    tpu.vector_store %arg9[%c0_8, %c0_9], %17 {strides = array<i32>} : memref<4x8xf32, #tpu.memory_space<vmem>>, vector<4x8xf32>,
    %19 = vector.shape_cast %12 : vector<8x128xi1> to vector<1x8x128xi1>
    %20 = vector.shape_cast %4 : vector<4x128xf32> to vector<4x1x128xf32>
    %c0_10 = arith.constant 0 : index
    %c0_11 = arith.constant 0 : index
    %21 = vector.load %arg10[%c0_10, %c0_11] : memref<4x8xf32, #tpu.memory_space<vmem>>, vector<4x8xf32>
    %cst_12 = arith.constant 0x7F800000 : f32
    %22 = vector.shape_cast %19 : vector<1x8x128xi1> to vector<1x8x128xi1>
    %23 = vector.broadcast %22 : vector<1x8x128xi1> to vector<4x8x128xi1>
    %24 = vector.shape_cast %20 : vector<4x1x128xf32> to vector<4x1x128xf32>
    %25 = vector.broadcast %24 : vector<4x1x128xf32> to vector<4x8x128xf32>
    %26 = vector.broadcast %cst_12 : f32 to vector<4x8x128xf32>
    %27 = arith.select %23, %25, %26 : vector<4x8x128xi1>, vector<4x8x128xf32>
    %cst_13 = arith.constant dense<0x7F800000> : vector<4x8xf32>
    %28 = vector.multi_reduction <minimumf>, %27, %cst_13 [2] : vector<4x8x128xf32> to vector<4x8xf32>
    %29 = arith.minimumf %21, %28 : vector<4x8xf32>
    %c0_14 = arith.constant 0 : index
    %c0_15 = arith.constant 0 : index
    %30 = vector.load %arg10[%c0_14, %c0_15] : memref<4x8xf32, #tpu.memory_space<vmem>>, vector<4x8xf32>
    tpu.vector_store %arg10[%c0_14, %c0_15], %29 {strides = array<i32>} : memref<4x8xf32, #tpu.memory_space<vmem>>, vector<4x8xf32>,
    %c0_16 = arith.constant 0 : index
    %c0_17 = arith.constant 0 : index
    %31 = vector.load %arg11[%c0_16, %c0_17] : memref<4x8xf32, #tpu.memory_space<vmem>>, vector<4x8xf32>
    %cst_18 = arith.constant 0xFF800000 : f32
    %32 = vector.shape_cast %19 : vector<1x8x128xi1> to vector<1x8x128xi1>
    %33 = vector.broadcast %32 : vector<1x8x128xi1> to vector<4x8x128xi1>
    %34 = vector.shape_cast %20 : vector<4x1x128xf32> to vector<4x1x128xf32>
    %35 = vector.broadcast %34 : vector<4x1x128xf32> to vector<4x8x128xf32>
    %36 = vector.broadcast %cst_18 : f32 to vector<4x8x128xf32>
    %37 = arith.select %33, %35, %36 : vector<4x8x128xi1>, vector<4x8x128xf32>
    %cst_19 = arith.constant dense<0xFF800000> : vector<4x8xf32>
    %38 = vector.multi_reduction <maximumf>, %37, %cst_19 [2] : vector<4x8x128xf32> to vector<4x8xf32>
    %39 = arith.maximumf %31, %38 : vector<4x8xf32>
    %c0_20 = arith.constant 0 : index
    %c0_21 = arith.constant 0 : index
    %40 = vector.load %arg11[%c0_20, %c0_21] : memref<4x8xf32, #tpu.memory_space<vmem>>, vector<4x8xf32>
    tpu.vector_store %arg11[%c0_20, %c0_21], %39 {strides = array<i32>} : memref<4x8xf32, #tpu.memory_space<vmem>>, vector<4x8xf32>,
    %c1_i32 = arith.constant 1 : i32
    %41 = arith.cmpi eq, %arg2, %c1_i32 : i32
    %42 = arith.extui %41 : i1 to i32
    %c0_i32_22 = arith.constant 0 : i32
    %43 = arith.cmpi ne, %42, %c0_i32_22 : i32
    scf.if %43 {
      %c0_23 = arith.constant 0 : index
      %c0_24 = arith.constant 0 : index
      %c0_25 = arith.constant 0 : index
      %44 = vector.load %arg5[%c0_23, %c0_24, %c0_25] : memref<1x1x8xf32, #tpu.memory_space<vmem>>, vector<1x1x8xf32>
      %45 = vector.shape_cast %44 : vector<1x1x8xf32> to vector<1x8xf32>
      %cst_26 = arith.constant 1.000000e+00 : f32
      %46 = vector.broadcast %cst_26 : f32 to vector<1x8xf32>
      %47 = arith.maximumf %45, %46 : vector<1x8xf32>
      %48 = tpu.reciprocal %47 {approx = true} : vector<1x8xf32> -> vector<1x8xf32>
      %49 = arith.mulf %47, %48 : vector<1x8xf32>
      %cst_27 = arith.constant 2.000000e+00 : f32
      %50 = vector.broadcast %cst_27 : f32 to vector<1x8xf32>
      %51 = arith.subf %50, %49 : vector<1x8xf32>
      %52 = arith.mulf %48, %51 : vector<1x8xf32>
      %cst_28 = arith.constant 0.000000e+00 : f32
      %53 = vector.broadcast %cst_28 : f32 to vector<1x8xf32>
      %54 = arith.cmpf oeq, %45, %53 : vector<1x8xf32>
      %c0_29 = arith.constant 0 : index
      %c0_30 = arith.constant 0 : index
      %55 = vector.load %arg9[%c0_29, %c0_30] : memref<4x8xf32, #tpu.memory_space<vmem>>, vector<4x8xf32>
      %56 = vector.broadcast %52 : vector<1x8xf32> to vector<4x8xf32>
      %57 = arith.mulf %55, %56 : vector<4x8xf32>
      %cst_31 = arith.constant 0.000000e+00 : f32
      %58 = vector.shape_cast %54 : vector<1x8xi1> to vector<1x8xi1>
      %59 = vector.broadcast %58 : vector<1x8xi1> to vector<4x8xi1>
      %60 = vector.broadcast %cst_31 : f32 to vector<4x8xf32>
      %61 = arith.select %59, %60, %57 : vector<4x8xi1>, vector<4x8xf32>
      %c0_32 = arith.constant 0 : index
      %c0_33 = arith.constant 0 : index
      %c0_34 = arith.constant 0 : index
      %62 = vector.load %arg6[%c0_32, %c0_33, %c0_34] : memref<1x4x8xf32, #tpu.memory_space<vmem>>, vector<1x4x8xf32>
      %63 = vector.shape_cast %62 : vector<1x4x8xf32> to vector<4x8xf32>
      %64 = vector.shape_cast %61 : vector<4x8xf32> to vector<1x4x8xf32>
      tpu.vector_store %arg6[%c0_32, %c0_33, %c0_34], %64 {strides = array<i32>} : memref<1x4x8xf32, #tpu.memory_space<vmem>>, vector<1x4x8xf32>,
      %c0_35 = arith.constant 0 : index
      %c0_36 = arith.constant 0 : index
      %65 = vector.load %arg10[%c0_35, %c0_36] : memref<4x8xf32, #tpu.memory_space<vmem>>, vector<4x8xf32>
      %cst_37 = arith.constant 0.000000e+00 : f32
      %66 = vector.shape_cast %54 : vector<1x8xi1> to vector<1x8xi1>
      %67 = vector.broadcast %66 : vector<1x8xi1> to vector<4x8xi1>
      %68 = vector.broadcast %cst_37 : f32 to vector<4x8xf32>
      %69 = arith.select %67, %68, %65 : vector<4x8xi1>, vector<4x8xf32>
      %c0_38 = arith.constant 0 : index
      %c0_39 = arith.constant 0 : index
      %c0_40 = arith.constant 0 : index
      %70 = vector.load %arg7[%c0_38, %c0_39, %c0_40] : memref<1x4x8xf32, #tpu.memory_space<vmem>>, vector<1x4x8xf32>
      %71 = vector.shape_cast %70 : vector<1x4x8xf32> to vector<4x8xf32>
      %72 = vector.shape_cast %69 : vector<4x8xf32> to vector<1x4x8xf32>
      tpu.vector_store %arg7[%c0_38, %c0_39, %c0_40], %72 {strides = array<i32>} : memref<1x4x8xf32, #tpu.memory_space<vmem>>, vector<1x4x8xf32>,
      %c0_41 = arith.constant 0 : index
      %c0_42 = arith.constant 0 : index
      %73 = vector.load %arg11[%c0_41, %c0_42] : memref<4x8xf32, #tpu.memory_space<vmem>>, vector<4x8xf32>
      %cst_43 = arith.constant 0.000000e+00 : f32
      %74 = vector.shape_cast %54 : vector<1x8xi1> to vector<1x8xi1>
      %75 = vector.broadcast %74 : vector<1x8xi1> to vector<4x8xi1>
      %76 = vector.broadcast %cst_43 : f32 to vector<4x8xf32>
      %77 = arith.select %75, %76, %73 : vector<4x8xi1>, vector<4x8xf32>
      %c0_44 = arith.constant 0 : index
      %c0_45 = arith.constant 0 : index
      %c0_46 = arith.constant 0 : index
      %78 = vector.load %arg8[%c0_44, %c0_45, %c0_46] : memref<1x4x8xf32, #tpu.memory_space<vmem>>, vector<1x4x8xf32>
      %79 = vector.shape_cast %78 : vector<1x4x8xf32> to vector<4x8xf32>
      %80 = vector.shape_cast %77 : vector<4x8xf32> to vector<1x4x8xf32>
      tpu.vector_store %arg8[%c0_44, %c0_45, %c0_46], %80 {strides = array<i32>} : memref<1x4x8xf32, #tpu.memory_space<vmem>>, vector<1x4x8xf32>,
    } else {
    }
    return
  }
  func.func @transform_0(%arg0: i32, %arg1: i32, %arg2: i32) -> (i32, i32, i32) {
    %c0_i32 = arith.constant 0 : i32
    %c0_i32_0 = arith.constant 0 : i32
    return %arg0, %c0_i32, %arg2 : i32, i32, i32
  }
  func.func @transform_1(%arg0: i32, %arg1: i32, %arg2: i32) -> (i32, i32, i32) {
    %c0_i32 = arith.constant 0 : i32
    %c0_i32_0 = arith.constant 0 : i32
    return %arg0, %c0_i32, %arg2 : i32, i32, i32
  }
  func.func @transform_2(%arg0: i32, %arg1: i32, %arg2: i32) -> (i32, i32, i32) {
    %c0_i32 = arith.constant 0 : i32
    %c0_i32_0 = arith.constant 0 : i32
    return %arg0, %c0_i32, %arg1 : i32, i32, i32
  }
  func.func @transform_3(%arg0: i32, %arg1: i32, %arg2: i32) -> (i32, i32, i32) {
    %c0_i32 = arith.constant 0 : i32
    %c0_i32_0 = arith.constant 0 : i32
    return %arg0, %c0_i32, %arg1 : i32, i32, i32
  }
  func.func @transform_4(%arg0: i32, %arg1: i32, %arg2: i32) -> (i32, i32, i32) {
    %c0_i32 = arith.constant 0 : i32
    %c0_i32_0 = arith.constant 0 : i32
    return %arg0, %c0_i32, %arg1 : i32, i32, i32
  }
  func.func @transform_5(%arg0: i32, %arg1: i32, %arg2: i32) -> (i32, i32, i32) {
    %c0_i32 = arith.constant 0 : i32
    %c0_i32_0 = arith.constant 0 : i32
    return %arg0, %c0_i32, %arg1 : i32, i32, i32
  }
}

</mosaic_0001>

<llo_original>
// kernel: tpu_custom_call.1
$region0: #{tpu_custom_call.1}
  #allocation0 [shape = 'u32[]', space=smem, size = 0x4, offset = 0x4, fixed_abs, tag = 'smem constant byte address 0x4 - core index']
  #allocation1 [shape = 'u32[144,128]{1,0:T(1,128)}', space=vmem, size = 0x12000, scoped, tag = 'internal scratch']
  #allocation2 [shape = 'f32[4,8]{1,0:T(4,128)}', space=vmem, size = 0x800, scoped, tag = 'scratch operand']
  #allocation3 [shape = 'f32[4,8]{1,0:T(4,128)}', space=vmem, size = 0x800, scoped, tag = 'scratch operand']
  #allocation4 [shape = 'f32[4,8]{1,0:T(4,128)}', space=vmem, size = 0x800, scoped, tag = 'scratch operand']
  %s0 = inlined_call_operand.hbm [shape: f32[2,4,256], index: 0, kind: input, shape index: {}]
  %s1 = inlined_call_operand.hbm [shape: s32[2,1,256], index: 1, kind: input, shape index: {}]
  %s2 = inlined_call_operand.vmem [shape: f32[2,1,8], index: 2, kind: input, shape index: {}]
  %s3 = inlined_call_operand.hbm [shape: f32[2,4,8], index: 3, kind: output, shape index: {0}]
  %s4 = inlined_call_operand.hbm [shape: f32[2,4,8], index: 4, kind: output, shape index: {1}]
  %s5 = inlined_call_operand.hbm [shape: f32[2,4,8], index: 5, kind: output, shape index: {2}]
  %6 = xla_tuple %s3, %s4, %s5
  %s7 = sld [smem:[#allocation0]]
  $region77: #{tpu_custom_call.1} parent=0
    _
  %s9 = ssub.s32 1, %s7
  %s10 = scalar_select 0, %s9, %s7
  $region1: #{tpu_custom_call.1} parent=0
    #allocation5 [shape = 'u8[4096]{0}', space=vmem, size = 0x1000, scoped, tag = 'input window, operand 0']
    #allocation6 [shape = 's32[2]{0}', space=sflag, size = 0x8, scoped, tag = 'scoped memory for tpu_custom_call.1']
    #allocation7 [shape = 's32[2]{0}', space=sflag, size = 0x8, scoped, tag = 'scoped memory for tpu_custom_call.1']
    #allocation8 [shape = 'u8[1024]{0}', space=vmem, size = 0x400, scoped, tag = 'input window, operand 1']
    #allocation9 [shape = 's32[2]{0}', space=sflag, size = 0x8, scoped, tag = 'scoped memory for tpu_custom_call.1']
    #allocation10 [shape = 'u8[4096]{0}', space=vmem, size = 0x1000, scoped, tag = 'output window, operand 0']
    #allocation11 [shape = 'u8[4096]{0}', space=vmem, size = 0x1000, scoped, tag = 'output window, operand 1']
    #allocation12 [shape = 's32[2]{0}', space=sflag, size = 0x8, scoped, tag = 'scoped memory for tpu_custom_call.1']
    #allocation13 [shape = 'u8[4096]{0}', space=vmem, size = 0x1000, scoped, tag = 'output window, operand 2']
    %11 = vsyncpa [#allocation6], 0
    %s12 = scalar_lea.sflag [#allocation6], 1
    %13 = vsyncpa %s12, 0
    %14 = vsyncpa [#allocation9], 0
    %s15 = scalar_lea.sflag [#allocation9], 1
    %16 = vsyncpa %s15, 0
    %17 = vsyncpa [#allocation7], 0
    %s18 = scalar_lea.sflag [#allocation7], 1
    %19 = vsyncpa %s18, 0
    %20 = vsyncpa [#allocation12], 0
    %s21 = scalar_lea.sflag [#allocation12], 1
    %22 = vsyncpa %s21, 0
    loop: start=0, step=1, limit=6
    $region2: #{tpu_custom_call.1} parent=1 // loop_pre_header
      _
    $region3: #{tpu_custom_call.1} parent=1 // loop_header
      %s24 = sphi 0, %s28
      %p25 = scmp.ge.s32.totalorder %s24, 6
      %s31 = sphi 0, %s50
      %s32 = sphi 0, %s46
      %s33 = sphi 0, %s42
      %s34 = sphi 0, %s31
      %s35 = sphi 0, %s32
      %s36 = sphi 0, %s33
      %s37 = sphi 0, %s34
      %s38 = sphi 0, %s35
      %s39 = sphi 0, %s36
      %s55 = sphi 0, %s57
      %s58 = sphi 0, %s55
      %s59 = sphi 0, %s58
      %s75 = sphi 0, %s59
      %s83 = sphi 0, %s85
      %s86 = sphi 0, %s83
      %s87 = sphi 0, %s86
      %s103 = sphi 0, %s87
      %s111 = sphi 0, %s113
      %s114 = sphi 0, %s111
      %s115 = sphi 0, %s114
      %s131 = sphi 0, %s115
      %s139 = sphi 0, %s141
      %s142 = sphi 0, %s139
      %s143 = sphi 0, %s142
      %s159 = sphi 0, %s143
      %s167 = sphi 0, %s169
      %s170 = sphi 0, %s167
      %s171 = sphi 0, %s170
      %s187 = sphi 0, %s171
      %s195 = sphi 0, %s197
      %s198 = sphi 0, %s195
      %s199 = sphi 0, %s198
      %s215 = sphi 0, %s199
    $region4: #{tpu_custom_call.1} parent=1 // loop_header_branch
      %27 = sbr.rel (%p25) target = $region8
    $region5: #{tpu_custom_call.1} parent=1 // loop_body
      %s29 = ssub.s32 %s24, 1
      %s30 = ssub.s32 %s24, 2
      %s40 = sadd.s32 1, %s33
      %p41 = scmp.ge.s32.totalorder %s40, 2
      %s42 = scalar_select %p41, 0, %s40
      %s43 = sadd.s32 1, %s32
      %s44 = scalar_select %p41, %s43, %s32
      %p45 = scmp.ge.s32.totalorder %s44, 1
      %s46 = scalar_select %p45, 0, %s44
      %s47 = sadd.s32 1, %s31
      %s48 = scalar_select %p45, %s47, %s31
      %p49 = scmp.ge.s32.totalorder %s48, 2
      %s50 = scalar_select %p49, 0, %s48
      %s51 = ssub.s32 %s31, %s50
      %s52 = ssub.s32 %s33, %s42
      %s53 = sor.u32 %s51, %s52
      %p54 = scmp.eq.s32.totalorder %s53, 0
      %s56 = sadd.s32 %s55, 1
      %s57 = scalar_select %p54, %s55, %s56
      %p60 = pneg %p54
      %p61 = scmp.eq.s32.totalorder %s24, 3
      %p62 = por %p60, %p61
      %p63 = scmp.ne.s32.totalorder %s55, %s58
      %p64 = scmp.eq.s32.totalorder %s24, 0
      %p65 = por %p63, %p64
      %p66 = scmp.ne.s32.totalorder %s55, %s58
      %p67 = scmp.eq.s32.totalorder %s29, 3
      %p68 = por %p66, %p67
      %p69 = scmp.ne.s32.totalorder %s58, %s59
      %p70 = scmp.eq.s32.totalorder %s29, 0
      %p71 = por %p69, %p70
      %p72 = scmp.ne.s32.totalorder %s58, %s59
      %p73 = scmp.eq.s32.totalorder %s30, 3
      %p74 = por %p72, %p73
      %p76 = scmp.ne.s32.totalorder %s59, %s75
      %p77 = scmp.eq.s32.totalorder %s30, 0
      %p78 = por %p76, %p77
      %s79 = ssub.s32 %s31, %s50
      %s80 = ssub.s32 %s33, %s42
      %s81 = sor.u32 %s79, %s80
      %p82 = scmp.eq.s32.totalorder %s81, 0
      %s84 = sadd.s32 %s83, 1
      %s85 = scalar_select %p82, %s83, %s84
      %p88 = pneg %p82
      %p89 = scmp.eq.s32.totalorder %s24, 3
      %p90 = por %p88, %p89
      %p91 = scmp.ne.s32.totalorder %s83, %s86
      %p92 = scmp.eq.s32.totalorder %s24, 0
      %p93 = por %p91, %p92
      %p94 = scmp.ne.s32.totalorder %s83, %s86
      %p95 = scmp.eq.s32.totalorder %s29, 3
      %p96 = por %p94, %p95
      %p97 = scmp.ne.s32.totalorder %s86, %s87
      %p98 = scmp.eq.s32.totalorder %s29, 0
      %p99 = por %p97, %p98
      %p100 = scmp.ne.s32.totalorder %s86, %s87
      %p101 = scmp.eq.s32.totalorder %s30, 3
      %p102 = por %p100, %p101
      %p104 = scmp.ne.s32.totalorder %s87, %s103
      %p105 = scmp.eq.s32.totalorder %s30, 0
      %p106 = por %p104, %p105
      %s107 = ssub.s32 %s31, %s50
      %s108 = ssub.s32 %s32, %s46
      %s109 = sor.u32 %s107, %s108
      %p110 = scmp.eq.s32.totalorder %s109, 0
      %s112 = sadd.s32 %s111, 1
      %s113 = scalar_select %p110, %s111, %s112
      %p116 = pneg %p110
      %p117 = scmp.eq.s32.totalorder %s24, 3
      %p118 = por %p116, %p117
      %p119 = scmp.ne.s32.totalorder %s111, %s114
      %p120 = scmp.eq.s32.totalorder %s24, 0
      %p121 = por %p119, %p120
      %p122 = scmp.ne.s32.totalorder %s111, %s114
      %p123 = scmp.eq.s32.totalorder %s29, 3
      %p124 = por %p122, %p123
      %p125 = scmp.ne.s32.totalorder %s114, %s115
      %p126 = scmp.eq.s32.totalorder %s29, 0
      %p127 = por %p125, %p126
      %p128 = scmp.ne.s32.totalorder %s114, %s115
      %p129 = scmp.eq.s32.totalorder %s30, 3
      %p130 = por %p128, %p129
      %p132 = scmp.ne.s32.totalorder %s115, %s131
      %p133 = scmp.eq.s32.totalorder %s30, 0
      %p134 = por %p132, %p133
      %s135 = ssub.s32 %s31, %s50
      %s136 = ssub.s32 %s32, %s46
      %s137 = sor.u32 %s135, %s136
      %p138 = scmp.eq.s32.totalorder %s137, 0
      %s140 = sadd.s32 %s139, 1
      %s141 = scalar_select %p138, %s139, %s140
      %p144 = pneg %p138
      %p145 = scmp.eq.s32.totalorder %s24, 3
      %p146 = por %p144, %p145
      %p147 = scmp.ne.s32.totalorder %s139, %s142
      %p148 = scmp.eq.s32.totalorder %s24, 0
      %p149 = por %p147, %p148
      %p150 = scmp.ne.s32.totalorder %s139, %s142
      %p151 = scmp.eq.s32.totalorder %s29, 3
      %p152 = por %p150, %p151
      %p153 = scmp.ne.s32.totalorder %s142, %s143
      %p154 = scmp.eq.s32.totalorder %s29, 0
      %p155 = por %p153, %p154
      %p156 = scmp.ne.s32.totalorder %s142, %s143
      %p157 = scmp.eq.s32.totalorder %s30, 3
      %p158 = por %p156, %p157
      %p160 = scmp.ne.s32.totalorder %s143, %s159
      %p161 = scmp.eq.s32.totalorder %s30, 0
      %p162 = por %p160, %p161
      %s163 = ssub.s32 %s31, %s50
      %s164 = ssub.s32 %s32, %s46
      %s165 = sor.u32 %s163, %s164
      %p166 = scmp.eq.s32.totalorder %s165, 0
      %s168 = sadd.s32 %s167, 1
      %s169 = scalar_select %p166, %s167, %s168
      %p172 = pneg %p166
      %p173 = scmp.eq.s32.totalorder %s24, 3
      %p174 = por %p172, %p173
      %p175 = scmp.ne.s32.totalorder %s167, %s170
      %p176 = scmp.eq.s32.totalorder %s24, 0
      %p177 = por %p175, %p176
      %p178 = scmp.ne.s32.totalorder %s167, %s170
      %p179 = scmp.eq.s32.totalorder %s29, 3
      %p180 = por %p178, %p179
      %p181 = scmp.ne.s32.totalorder %s170, %s171
      %p182 = scmp.eq.s32.totalorder %s29, 0
      %p183 = por %p181, %p182
      %p184 = scmp.ne.s32.totalorder %s170, %s171
      %p185 = scmp.eq.s32.totalorder %s30, 3
      %p186 = por %p184, %p185
      %p188 = scmp.ne.s32.totalorder %s171, %s187
      %p189 = scmp.eq.s32.totalorder %s30, 0
      %p190 = por %p188, %p189
      %s191 = ssub.s32 %s31, %s50
      %s192 = ssub.s32 %s32, %s46
      %s193 = sor.u32 %s191, %s192
      %p194 = scmp.eq.s32.totalorder %s193, 0
      %s196 = sadd.s32 %s195, 1
      %s197 = scalar_select %p194, %s195, %s196
      %p200 = pneg %p194
      %p201 = scmp.eq.s32.totalorder %s24, 3
      %p202 = por %p200, %p201
      %p203 = scmp.ne.s32.totalorder %s195, %s198
      %p204 = scmp.eq.s32.totalorder %s24, 0
      %p205 = por %p203, %p204
      %p206 = scmp.ne.s32.totalorder %s195, %s198
      %p207 = scmp.eq.s32.totalorder %s29, 3
      %p208 = por %p206, %p207
      %p209 = scmp.ne.s32.totalorder %s198, %s199
      %p210 = scmp.eq.s32.totalorder %s29, 0
      %p211 = por %p209, %p210
      %p212 = scmp.ne.s32.totalorder %s198, %s199
      %p213 = scmp.eq.s32.totalorder %s30, 3
      %p214 = por %p212, %p213
      %p216 = scmp.ne.s32.totalorder %s199, %s215
      %p217 = scmp.eq.s32.totalorder %s30, 0
      %p218 = por %p216, %p217
      %p219 = scmp.le.s32.totalorder 1, %s24
      %p220 = scmp.lt.s32.totalorder %s24, 5
      %p221 = pnand %p219, %p220
      %p222 = pneg %p221
      // Predicated region
      $region9: #{tpu_custom_call.1} parent=5 // pred_check
        _
      $region10: #{tpu_custom_call.1} parent=5 // pred_check_branch
        %224 = sbr.rel (%p221) target = $region12
      $region11: #{tpu_custom_call.1} parent=5 // pred_region
        %s225 = ssub.s32 %s24, 1
      $region12: #{tpu_custom_call.1} parent=5 // pred_fallthru
        _
      %p226 = scmp.lt.s32.totalorder %s24, 4
      // Predicated region
      $region13: #{tpu_custom_call.1} parent=5 // pred_check
        %p227 = pneg %p226
      $region14: #{tpu_custom_call.1} parent=5 // pred_check_branch
        %229 = sbr.rel (%p227) target = $region16
      $region15: #{tpu_custom_call.1} parent=5 // pred_region
        // Predicated region
        $region17: #{tpu_custom_call.1} parent=15 // pred_check
          %p230 = pneg %p65
        $region18: #{tpu_custom_call.1} parent=15 // pred_check_branch
          %232 = sbr.rel (%p230) target = $region20
        $region19: #{tpu_custom_call.1} parent=15 // pred_region
          %s233 = sand.u32 %s55, 1
          %s234 = scalar_lea.sflag [#allocation6], %s233
          %s235 = sand.u32 %s55, 1
          %s236 = smul.addr %s235, 4
          %s237 = scalar_lea.vmem [#allocation5], %s236
          %s239 = ssub.s32 64, 64
          %240 = vsyncadd %s234, %s239
          %s241 = smul.addr %s31, 2
          %s242 = sadd.s32 %s33, %s241
          %s243 = smul.addr %s242, 64
          %s244 = scalar_lea.hbm %s0, %s243
          %s246 = sshll.u32 %s237, 4
          %s247 = int_to_ptr.vmem [resolvable:$true] %s246
          %249 = dma.hbm_to_vmem [thread:$0]  %s244, 64, %s247, %s234
        $region20: #{tpu_custom_call.1} parent=15 // pred_fallthru
          _
        // Predicated region
        $region21: #{tpu_custom_call.1} parent=15 // pred_check
          %p250 = pneg %p93
        $region22: #{tpu_custom_call.1} parent=15 // pred_check_branch
          %252 = sbr.rel (%p250) target = $region24
        $region23: #{tpu_custom_call.1} parent=15 // pred_region
          %s253 = sand.u32 %s83, 1
          %s254 = scalar_lea.sflag [#allocation9], %s253
          %s255 = sand.u32 %s83, 1
          %s256 = scalar_lea.vmem [#allocation8], %s255
          %s258 = ssub.s32 16, 16
          %259 = vsyncadd %s254, %s258
          %s260 = smul.addr %s31, 2
          %s261 = sadd.s32 %s33, %s260
          %s262 = smul.addr %s261, 16
          %s263 = scalar_lea.hbm %s1, %s262
          %s265 = sshll.u32 %s256, 4
          %s266 = int_to_ptr.vmem [resolvable:$true] %s265
          %268 = dma.hbm_to_vmem [thread:$0]  %s263, 16, %s266, %s254
        $region24: #{tpu_custom_call.1} parent=15 // pred_fallthru
          _
        // Predicated region
        $region25: #{tpu_custom_call.1} parent=15 // pred_check
          %p269 = pneg %p121
        $region26: #{tpu_custom_call.1} parent=15 // pred_check_branch
          %271 = sbr.rel (%p269) target = $region28
        $region27: #{tpu_custom_call.1} parent=15 // pred_region
          %p272 = scmp.lt.s32.totalorder %s31, 1
          %s273 = scalar_select %p272, %s31, 1
          %p274 = scmp.lt.s32.totalorder %s32, 0
          %s275 = scalar_select %p274, %s32, 0
          %s276 = sadd.s32 %s275, %s273
          %s277 = scalar_lea.vmem %s2, %s276
        $region28: #{tpu_custom_call.1} parent=15 // pred_fallthru
          _
      $region16: #{tpu_custom_call.1} parent=5 // pred_fallthru
        _
      %p278 = scmp.le.s32.totalorder 1, %s24
      %p279 = scmp.lt.s32.totalorder %s24, 5
      %p280 = pnand %p278, %p279
      %p281 = pneg %p280
      // Predicated region
      $region29: #{tpu_custom_call.1} parent=5 // pred_check
        _
      $region30: #{tpu_custom_call.1} parent=5 // pred_check_branch
        %283 = sbr.rel (%p280) target = $region32
      $region31: #{tpu_custom_call.1} parent=5 // pred_region
        %s284 = ssub.s32 %s24, 1
        %s285 = sand.u32 %s58, 1
        %s286 = scalar_lea.sflag [#allocation6], %s285
        %s287 = sand.u32 %s58, 1
        %s288 = smul.addr %s287, 4
        %s289 = scalar_lea.vmem [#allocation5], %s288
        // Predicated region
        $region33: #{tpu_custom_call.1} parent=31 // pred_check
          %p290 = pneg %p71
        $region34: #{tpu_custom_call.1} parent=31 // pred_check_branch
          %292 = sbr.rel (%p290) target = $region36
        $region35: #{tpu_custom_call.1} parent=31 // pred_region
          %293 = dma.done %s286, 64
        $region36: #{tpu_custom_call.1} parent=31 // pred_fallthru
          _
        %s294 = sand.u32 %s86, 1
        %s295 = scalar_lea.sflag [#allocation9], %s294
        %s296 = sand.u32 %s86, 1
        %s297 = scalar_lea.vmem [#allocation8], %s296
        // Predicated region
        $region37: #{tpu_custom_call.1} parent=31 // pred_check
          %p298 = pneg %p99
        $region38: #{tpu_custom_call.1} parent=31 // pred_check_branch
          %300 = sbr.rel (%p298) target = $region40
        $region39: #{tpu_custom_call.1} parent=31 // pred_region
          %301 = dma.done %s295, 16
        $region40: #{tpu_custom_call.1} parent=31 // pred_fallthru
          _
        %s302 = sand.u32 %s58, 1
        %s303 = scalar_lea.sflag [#allocation6], %s302
        %s304 = sand.u32 %s58, 1
        %s305 = smul.addr %s304, 4
        %s306 = scalar_lea.vmem [#allocation5], %s305
        %p307 = pneg %p71
        %p308 = pneg %p68
        %s309 = sand.u32 %s86, 1
        %s310 = scalar_lea.sflag [#allocation9], %s309
        %s311 = sand.u32 %s86, 1
        %s312 = scalar_lea.vmem [#allocation8], %s311
        %p313 = pneg %p99
        %p314 = pneg %p96
        %p315 = scmp.lt.s32.totalorder %s34, 1
        %s316 = scalar_select %p315, %s34, 1
        %p317 = scmp.lt.s32.totalorder %s35, 0
        %s318 = scalar_select %p317, %s35, 0
        %s319 = sadd.s32 %s318, %s316
        %s320 = scalar_lea.vmem %s2, %s319
        %p321 = pneg %p127
        %p322 = pneg %p124
        %p323 = pneg %p155
        %p324 = pneg %p152
        %s325 = sand.u32 %s142, 1
        %s326 = scalar_lea.sflag [#allocation7], %s325
        %s327 = sand.u32 %s142, 1
        %s328 = smul.addr %s327, 4
        %s329 = scalar_lea.vmem [#allocation10], %s328
        %p330 = pneg %p183
        %p331 = pneg %p180
        %s332 = sand.u32 %s29, 1
        %s333 = scalar_lea.sflag [#allocation12], %s332
        %s334 = sand.u32 %s170, 1
        %s335 = smul.addr %s334, 4
        %s336 = scalar_lea.vmem [#allocation11], %s335
        %p337 = pneg %p211
        %p338 = pneg %p208
        %s339 = sand.u32 %s29, 1
        %s340 = scalar_lea.sflag [#allocation12], %s339
        %s341 = sand.u32 %s198, 1
        %s342 = smul.addr %s341, 4
        %s343 = scalar_lea.vmem [#allocation13], %s342
        %p344 = scmp.lt.s32.totalorder %s34, 1
        %s345 = scalar_select %p344, %s34, 1
        %p346 = scmp.lt.s32.totalorder %s35, 0
        %s347 = scalar_select %p346, %s35, 0
        %s348 = sadd.s32 %s347, %s345
        %s349 = scalar_lea.vmem %s2, %s348
        %p350 = scmp.eq.s32.totalorder %s36, 0
        // Predicated region
        $region41: #{tpu_custom_call.1} parent=31 // pred_check
          %p351 = pneg %p350
        $region42: #{tpu_custom_call.1} parent=31 // pred_check_branch
          %353 = sbr.rel (%p351) target = $region44
        $region43: #{tpu_custom_call.1} parent=31 // pred_region
          %vm354 = vcmask 60416
          %355 = vst.msk [vmem:[#allocation2] sm:$0xf] %vm354, 0.0
          %356 = vst.msk [vmem:[#allocation3] sm:$0xf] %vm354, inf
          %357 = vst.msk [vmem:[#allocation4] sm:$0xf] %vm354, -inf
        $region44: #{tpu_custom_call.1} parent=31 // pred_fallthru
          _
        %v358 = vld [vmem:[%s289] sm:$0xf]
        %v359 = vld [vmem:[%s297] sm:$0x1]
        %s360 = smul.u32 %s35, 8
        %v361 = vlaneseq
        %v362 = vshrl.u32 %v361, 7
        %v363 = vstv %s360
        %v364 = vadd.s32 %v363, %v362
        %v365 = vlaneseq
        %v366 = vshrl.u32 %v365, 7
        %v367 = vsub.s32 0, %v366
        %v368 = vrot.slane %v359, %v367
        %vm369 = vcmp.eq.s32.totalorder %v368, %v364
        %v370 = vld [vmem:[#allocation2] sm:$0xf]
        %v371 = vsel %vm369, 1, 0
        %v372 = vcvt.s32.f32 %v371
        %373 = vmatprep.subr.mxu0 0.0
        %374 = vmatpush1.xpose.msra.mxu0 %v372
        %375 = vmatprep.subr.mxu0 0.0
        %376 = vmatpush1.xpose.msra.mxu0 0.0
        %377 = vmatprep.subr.mxu0 0.0
        %378 = vmatpush1.xpose.msra.mxu0 0.0
        %379 = vmatprep.subr.mxu0 0.0
        %380 = vmatpush1.xpose.msra.mxu0 0.0
        %381 = vmatprep.subr.mxu0 0.0
        %382 = vmatpush1.xpose.msra.mxu0 0.0
        %383 = vmatprep.subr.mxu0 0.0
        %384 = vmatpush1.xpose.msra.mxu0 0.0
        %385 = vmatprep.subr.mxu0 0.0
        %386 = vmatpush1.xpose.msra.mxu0 0.0
        %387 = vmatprep.subr.mxu0 0.0
        %388 = vmatpush1.xpose.msra.mxu0 0.0
        %389 = vmatprep.subr.mxu0 0.0
        %390 = vmatpush1.xpose.msra.mxu0 0.0
        %391 = vmatprep.subr.mxu0 0.0
        %392 = vmatpush1.xpose.msra.mxu0 0.0
        %393 = vmatprep.subr.mxu0 0.0
        %394 = vmatpush1.xpose.msra.mxu0 0.0
        %395 = vmatprep.subr.mxu0 0.0
        %396 = vmatpush1.xpose.msra.mxu0 0.0
        %397 = vmatprep.subr.mxu0 0.0
        %398 = vmatpush1.xpose.msra.mxu0 0.0
        %399 = vmatprep.subr.mxu0 0.0
        %400 = vmatpush1.xpose.msra.mxu0 0.0
        %401 = vmatprep.subr.mxu0 0.0
        %402 = vmatpush1.xpose.msra.mxu0 0.0
        %403 = vmatprep.subr.mxu0 0.0
        %404 = vmatpush1.xpose.msra.mxu0 0.0
        %405 = vmatprep.subr.mxu0 0.0
        %406 = vmatpush1.xpose.msra.mxu0 0.0
        %407 = vmatprep.subr.mxu0 0.0
        %408 = vmatpush1.xpose.msra.mxu0 0.0
        %409 = vmatprep.subr.mxu0 0.0
        %410 = vmatpush1.xpose.msra.mxu0 0.0
        %411 = vmatprep.subr.mxu0 0.0
        %412 = vmatpush1.xpose.msra.mxu0 0.0
        %413 = vmatprep.subr.mxu0 0.0
        %414 = vmatpush1.xpose.msra.mxu0 0.0
        %415 = vmatprep.subr.mxu0 0.0
        %416 = vmatpush1.xpose.msra.mxu0 0.0
        %417 = vmatprep.subr.mxu0 0.0
        %418 = vmatpush1.xpose.msra.mxu0 0.0
        %419 = vmatprep.subr.mxu0 0.0
        %420 = vmatpush1.xpose.msra.mxu0 0.0
        %421 = vmatprep.subr.mxu0 0.0
        %422 = vmatpush1.xpose.msra.mxu0 0.0
        %423 = vmatprep.subr.mxu0 0.0
        %424 = vmatpush1.xpose.msra.mxu0 0.0
        %425 = vmatprep.subr.mxu0 0.0
        %426 = vmatpush1.xpose.msra.mxu0 0.0
        %427 = vmatprep.subr.mxu0 0.0
        %428 = vmatpush1.xpose.msra.mxu0 0.0
        %429 = vmatprep.subr.mxu0 0.0
        %430 = vmatpush1.xpose.msra.mxu0 0.0
        %431 = vmatprep.subr.mxu0 0.0
        %432 = vmatpush1.xpose.msra.mxu0 0.0
        %433 = vmatprep.subr.mxu0 0.0
        %434 = vmatpush1.xpose.msra.mxu0 0.0
        %435 = vmatprep.subr.mxu0 0.0
        %436 = vmatpush1.xpose.msra.mxu0 0.0
        %437 = vmatprep.mubr.f32.mxu0 0.0
        %438 = vmatmul.mubr.f32.gmra.mrb[0].mxu0 %v358
        %v439 = vpop.f32.mrb[0].mxu0
        %v440 = vadd.f32 0.0, %v439
        %v441 = vpop.f32.mrb[0].mxu0
        %442 = vdwg.mxu0
        %v443 = vadd.f32 %v370, %v440
        %vm444 = vcmask 60416
        %445 = vst.msk [vmem:[#allocation2] sm:$0xf] %vm444, %v443
        %v448 = vunpack.c.l.s4 1966171168
        %v449 = vunpack.c.0.s8 %v448
        %v450 = vlaneseq
        %v451 = vshrl.u32 %v450, 7
        %v452 = vsub.s32 %v449, %v451
        %v453 = vrot.slane %v358, %v452
        %v454 = vcombine.high %v453, %v453
        %v456 = vunpack.c.l.s4 1966171168
        %v457 = vunpack.c.0.s8 %v456
        %v458 = vlaneseq
        %v459 = vshrl.u32 %v458, 7
        %v460 = vsub.s32 %v457, %v459
        %v461 = vrot.slane %v453, %v460
        %v463 = vunpack.c.l.s4 1966171168
        %v464 = vunpack.c.0.s8 %v463
        %v465 = vlaneseq
        %v466 = vshrl.u32 %v465, 7
        %v467 = vsub.s32 %v464, %v466
        %v468 = vrot.slane %v454, %v467
        %v469 = vcombine.high %v461, %v461
        %v470 = vcombine.high %v468, %v468
        %v471 = vld [vmem:[#allocation3] sm:$0xf]
        %vm472 = vcmp.eq.s32.totalorder %v371, 1
        %v473 = vlaneseq
        %v474 = vshrl.u32 %v473, 7
        %v475 = vsub.s32 0, %v474
        %v476 = vrot.slane %v461, %v475
        %v477 = vlaneseq
        %v478 = vshrl.u32 %v477, 7
        %v479 = vsub.s32 0, %v478
        %v480 = vrot.slane %v468, %v479
        %v481 = vlaneseq
        %v482 = vshrl.u32 %v481, 7
        %v483 = vsub.s32 0, %v482
        %v484 = vrot.slane %v469, %v483
        %v485 = vlaneseq
        %v486 = vshrl.u32 %v485, 7
        %v487 = vsub.s32 0, %v486
        %v488 = vrot.slane %v470, %v487
        %v493 = vsel %vm472, %v476, inf
        %v494 = vsel %vm472, %v480, inf
        %v495 = vsel %vm472, %v484, inf
        %v496 = vsel %vm472, %v488, inf
        %497 = vmin.xlane.f32.xlu0 %v493
        %v498 = vpop.xlane.xlu0 %497
        %499 = vmin.xlane.f32.xlu0 %v494
        %v500 = vpop.xlane.xlu0 %499
        %501 = vmin.xlane.f32.xlu0 %v495
        %v502 = vpop.xlane.xlu0 %501
        %503 = vmin.xlane.f32.xlu0 %v496
        %v504 = vpop.xlane.xlu0 %503
        %v509 = vlaneseq
        %v510 = vand.u32 %v509, 127
        %v511 = vlaneseq
        %v512 = vshrl.u32 %v511, 7
        %v513 = vsub.s32 %v510, %v512
        %v514 = vrot.slane %v498, %v513
        %v515 = vlaneseq
        %v516 = vshrl.u32 %v515, 7
        %v517 = vsub.s32 %v510, %v516
        %v518 = vrot.slane %v500, %v517
        %v519 = vlaneseq
        %v520 = vshrl.u32 %v519, 7
        %v521 = vsub.s32 %v510, %v520
        %v522 = vrot.slane %v502, %v521
        %v523 = vlaneseq
        %v524 = vshrl.u32 %v523, 7
        %v525 = vsub.s32 %v510, %v524
        %v526 = vrot.slane %v504, %v525
        %vm527 = vcmask 1041409
        %v528 = vsel %vm527, %v518, %v514
        %vm529 = vcmask 1042434
        %v530 = vsel %vm529, %v522, %v528
        %vm531 = vcmask 1043459
        %v532 = vsel %vm531, %v526, %v530
        %v534 = vmin.f32 %v471, %v532
        %535 = vst.msk [vmem:[#allocation3] sm:$0xf] %vm444, %v534
        %v536 = vld [vmem:[#allocation4] sm:$0xf]
        %v537 = vsel %vm472, %v476, -inf
        %v538 = vsel %vm472, %v480, -inf
        %v539 = vsel %vm472, %v484, -inf
        %v540 = vsel %vm472, %v488, -inf
        %541 = vmax.xlane.f32.xlu0 %v537
        %v542 = vpop.xlane.xlu0 %541
        %543 = vmax.xlane.f32.xlu0 %v538
        %v544 = vpop.xlane.xlu0 %543
        %545 = vmax.xlane.f32.xlu0 %v539
        %v546 = vpop.xlane.xlu0 %545
        %547 = vmax.xlane.f32.xlu0 %v540
        %v548 = vpop.xlane.xlu0 %547
        %v553 = vlaneseq
        %v554 = vshrl.u32 %v553, 7
        %v555 = vsub.s32 %v510, %v554
        %v556 = vrot.slane %v542, %v555
        %v557 = vlaneseq
        %v558 = vshrl.u32 %v557, 7
        %v559 = vsub.s32 %v510, %v558
        %v560 = vrot.slane %v544, %v559
        %v561 = vlaneseq
        %v562 = vshrl.u32 %v561, 7
        %v563 = vsub.s32 %v510, %v562
        %v564 = vrot.slane %v546, %v563
        %v565 = vlaneseq
        %v566 = vshrl.u32 %v565, 7
        %v567 = vsub.s32 %v510, %v566
        %v568 = vrot.slane %v548, %v567
        %v569 = vsel %vm527, %v560, %v556
        %v570 = vsel %vm529, %v564, %v569
        %v571 = vsel %vm531, %v568, %v570
        %v573 = vmax.f32 %v536, %v571
        %574 = vst.msk [vmem:[#allocation4] sm:$0xf] %vm444, %v573
        %p575 = scmp.eq.s32.totalorder %s36, 1
        // Predicated region
        $region45: #{tpu_custom_call.1} parent=31 // pred_check
          %p576 = pneg %p575
        $region46: #{tpu_custom_call.1} parent=31 // pred_check_branch
          %578 = sbr.rel (%p576) target = $region48
        $region47: #{tpu_custom_call.1} parent=31 // pred_region
          %v579 = vld [vmem:[%s349] sm:$0x1]
          %v580 = vmax.f32 %v579, 1.0
          %v581 = vrcp.pop %v580
          %v582 = vmul.f32 %v580, %v581
          %v583 = vsub.f32 2.0, %v582
          %v584 = vmul.f32 %v581, %v583
          %vm585 = vcmp.eq.f32.partialorder %v579, 0.0
          %v586 = vld [vmem:[#allocation2] sm:$0xf]
          %v588 = vlaneseq
          %v589 = vshrl.u32 %v588, 7
          %v590 = vsub.s32 0, %v589
          %v591 = vrot.slane %v584, %v590
          %v593 = vmul.f32 %v586, %v591
          %v594 = vsel %vm585, 1, 0
          %v595 = vlaneseq
          %v596 = vshrl.u32 %v595, 7
          %v597 = vsub.s32 0, %v596
          %v598 = vrot.slane %v594, %v597
          %vm599 = vcmp.eq.s32.totalorder %v598, 1
          %v600 = vsel %vm599, 0.0, %v593
          %601 = vst.msk [vmem:[%s329] sm:$0xf] %vm444, %v600
          %v602 = vld [vmem:[#allocation3] sm:$0xf]
          %v603 = vsel %vm599, 0.0, %v602
          %604 = vst.msk [vmem:[%s336] sm:$0xf] %vm444, %v603
          %v605 = vld [vmem:[#allocation4] sm:$0xf]
          %v606 = vsel %vm599, 0.0, %v605
          %607 = vst.msk [vmem:[%s343] sm:$0xf] %vm444, %v606
        $region48: #{tpu_custom_call.1} parent=31 // pred_fallthru
          _
        %s608 = sand.u32 %s142, 1
        %s609 = scalar_lea.sflag [#allocation7], %s608
        %s610 = sand.u32 %s142, 1
        %s611 = smul.addr %s610, 4
        %s612 = scalar_lea.vmem [#allocation10], %s611
        %s613 = sand.u32 %s29, 1
        %s614 = scalar_lea.sflag [#allocation12], %s613
        %s615 = sand.u32 %s170, 1
        %s616 = smul.addr %s615, 4
        %s617 = scalar_lea.vmem [#allocation11], %s616
        %s618 = sand.u32 %s29, 1
        %s619 = scalar_lea.sflag [#allocation12], %s618
        %s620 = sand.u32 %s198, 1
        %s621 = smul.addr %s620, 4
        %s622 = scalar_lea.vmem [#allocation13], %s621
        // Predicated region
        $region49: #{tpu_custom_call.1} parent=31 // pred_check
          %p623 = pneg %p152
        $region50: #{tpu_custom_call.1} parent=31 // pred_check_branch
          %625 = sbr.rel (%p623) target = $region52
        $region51: #{tpu_custom_call.1} parent=31 // pred_region
          %s627 = ssub.s32 64, 64
          %628 = vsyncadd %s609, %s627
          %s629 = sadd.s32 %s35, %s34
          %s630 = smul.addr %s629, 64
          %s631 = scalar_lea.hbm %s3, %s630
          %s633 = sshll.u32 %s612, 4
          %s634 = int_to_ptr.vmem [resolvable:$true] %s633
          %636 = dma.vmem_to_hbm [thread:$0]  %s634, 64, %s631, %s609
        $region52: #{tpu_custom_call.1} parent=31 // pred_fallthru
          _
        // Predicated region
        $region53: #{tpu_custom_call.1} parent=31 // pred_check
          %p637 = pneg %p180
        $region54: #{tpu_custom_call.1} parent=31 // pred_check_branch
          %639 = sbr.rel (%p637) target = $region56
        $region55: #{tpu_custom_call.1} parent=31 // pred_region
          %s641 = ssub.s32 64, 64
          %642 = vsyncadd %s614, %s641
          %s643 = sadd.s32 %s35, %s34
          %s644 = smul.addr %s643, 64
          %s645 = scalar_lea.hbm %s4, %s644
          %s647 = sshll.u32 %s617, 4
          %s648 = int_to_ptr.vmem [resolvable:$true] %s647
          %650 = dma.vmem_to_hbm [thread:$0]  %s648, 64, %s645, %s614
        $region56: #{tpu_custom_call.1} parent=31 // pred_fallthru
          _
        // Predicated region
        $region57: #{tpu_custom_call.1} parent=31 // pred_check
          %p651 = pneg %p208
        $region58: #{tpu_custom_call.1} parent=31 // pred_check_branch
          %653 = sbr.rel (%p651) target = $region60
        $region59: #{tpu_custom_call.1} parent=31 // pred_region
          %s655 = ssub.s32 64, 64
          %656 = vsyncadd %s619, %s655
          %s657 = sadd.s32 %s35, %s34
          %s658 = smul.addr %s657, 64
          %s659 = scalar_lea.hbm %s5, %s658
          %s661 = sshll.u32 %s622, 4
          %s662 = int_to_ptr.vmem [resolvable:$true] %s661
          %664 = dma.vmem_to_hbm [thread:$0]  %s662, 64, %s659, %s619
        $region60: #{tpu_custom_call.1} parent=31 // pred_fallthru
          _
      $region32: #{tpu_custom_call.1} parent=5 // pred_fallthru
        _
      %p665 = scmp.le.s32.totalorder 2, %s24
      // Predicated region
      $region61: #{tpu_custom_call.1} parent=5 // pred_check
        %p666 = pneg %p665
      $region62: #{tpu_custom_call.1} parent=5 // pred_check_branch
        %668 = sbr.rel (%p666) target = $region64
      $region63: #{tpu_custom_call.1} parent=5 // pred_region
        %s669 = ssub.s32 %s24, 2
        // Predicated region
        $region65: #{tpu_custom_call.1} parent=63 // pred_check
          %p670 = pneg %p158
        $region66: #{tpu_custom_call.1} parent=63 // pred_check_branch
          %672 = sbr.rel (%p670) target = $region68
        $region67: #{tpu_custom_call.1} parent=63 // pred_region
          %s673 = sand.u32 %s143, 1
          %s674 = scalar_lea.sflag [#allocation7], %s673
          %s675 = sand.u32 %s143, 1
          %s676 = smul.addr %s675, 4
          %s677 = scalar_lea.vmem [#allocation10], %s676
          %678 = dma.done %s674, 64
        $region68: #{tpu_custom_call.1} parent=63 // pred_fallthru
          _
        // Predicated region
        $region69: #{tpu_custom_call.1} parent=63 // pred_check
          %p679 = pneg %p186
        $region70: #{tpu_custom_call.1} parent=63 // pred_check_branch
          %681 = sbr.rel (%p679) target = $region72
        $region71: #{tpu_custom_call.1} parent=63 // pred_region
          %s682 = sand.u32 %s30, 1
          %s683 = scalar_lea.sflag [#allocation12], %s682
          %s684 = sand.u32 %s171, 1
          %s685 = smul.addr %s684, 4
          %s686 = scalar_lea.vmem [#allocation11], %s685
          %687 = dma.done %s683, 64
        $region72: #{tpu_custom_call.1} parent=63 // pred_fallthru
          _
        // Predicated region
        $region73: #{tpu_custom_call.1} parent=63 // pred_check
          %p688 = pneg %p214
        $region74: #{tpu_custom_call.1} parent=63 // pred_check_branch
          %690 = sbr.rel (%p688) target = $region76
        $region75: #{tpu_custom_call.1} parent=63 // pred_region
          %s691 = sand.u32 %s30, 1
          %s692 = scalar_lea.sflag [#allocation12], %s691
          %s693 = sand.u32 %s199, 1
          %s694 = smul.addr %s693, 4
          %s695 = scalar_lea.vmem [#allocation13], %s694
          %696 = dma.done %s692, 64
        $region76: #{tpu_custom_call.1} parent=63 // pred_fallthru
          _
      $region64: #{tpu_custom_call.1} parent=5 // pred_fallthru
        _
    $region6: #{tpu_custom_call.1} parent=1 // loop_footer
      %s28 = sadd.s32 1, %s24
    $region7: #{tpu_custom_call.1} parent=1 // loop_footer_branch
      %23 = sbr.rel target = $region3
    $region8: #{tpu_custom_call.1} parent=1 // loop_exit
      _
    %697 = vsyncpa [#allocation6], 1
    %s698 = scalar_lea.sflag [#allocation6], 1
    %699 = vsyncpa %s698, 1
    %700 = vsyncpa [#allocation9], 1
    %s701 = scalar_lea.sflag [#allocation9], 1
    %702 = vsyncpa %s701, 1
    %703 = vsyncpa [#allocation7], 1
    %s704 = scalar_lea.sflag [#allocation7], 1
    %705 = vsyncpa %s704, 1
    %706 = vsyncpa [#allocation12], 1
    %s707 = scalar_lea.sflag [#allocation12], 1
    %708 = vsyncpa %s707, 1

</llo_original>
